<compile_context>
chip_gen: v7x
topology: tpu7x:2x2x1
jax: 0.10.0
libtpu: 0.0.40
codegen_flags: <defaults>
</compile_context>

<pallas_src>
import functools

import jax
import jax.numpy as jnp
from jax.experimental import pallas as pl
from jax.experimental.pallas import tpu as pltpu


def _round_up(x, m):
    return (x + m - 1) // m * m


def _readout_seq_kernel(x_ref, wT_ref, p_ref, mem0_ref, out_ref, mem_scr, *, tt, tb):
    """One (b_tile, t_tile) grid step covering `tt` consecutive timesteps.

    x_ref:    (tt, tb, I_pad)  bf16  input spikes for tt timesteps
    wT_ref:   (I_pad, O_pad)   bf16  W.T, resident in VMEM across the whole grid
    p_ref:    (3, O_pad)       f32   rows: [bias, alpha, 1 - alpha]
    mem0_ref: (tb, O_pad)      f32   initial membrane state for this batch tile
    out_ref:  (tt, tb, O_pad)  f32   mem after each of the tt timesteps
    mem_scr:  (tb, O_pad)      f32   VMEM-resident carry across the time axis
    """
    t = pl.program_id(1)

    @pl.when(t == 0)
    def _init():
        mem_scr[...] = mem0_ref[...]

    # One big MXU matmul for all tt timesteps of this block:
    # (tt*tb, I_pad) x (I_pad, O_pad) bf16 -> f32.
    i_pad = x_ref.shape[-1]
    x_flat = x_ref[...].reshape(tt * tb, i_pad)
    d_all = jnp.dot(x_flat, wT_ref[...], preferred_element_type=jnp.float32)

    bias = p_ref[0:1, :]             # (1, O_pad)
    alpha = p_ref[1:2, :]            # (1, O_pad)
    one_minus_alpha = p_ref[2:3, :]  # (1, O_pad)

    # Per-timestep leaky-integrator recurrence (elementwise, VPU), static unroll.
    mem = mem_scr[...]
    for s in range(tt):
        d_s = d_all[s * tb:(s + 1) * tb, :]
        mem = alpha * mem + one_minus_alpha * (d_s + bias)
        out_ref[s] = mem
    mem_scr[...] = mem


@jax.jit
def readout_integrator_forward_seq(x_seq, weight, bias, tau_m, mem0):
    """Run T timesteps of readout_integrator in a single fused Pallas kernel.

    x_seq:  (T, B, input_dim)   spikes (any float/bool-like dtype)
    weight: (output_dim, input_dim) f32   nn.Linear weight
    bias:   (output_dim,)           f32
    tau_m:  (output_dim,)           f32
    mem0:   (B, output_dim)         f32   initial membrane state
    returns mem for every timestep: (T, B, output_dim) f32
    """
    T, B, I = x_seq.shape
    O = weight.shape[0]

    # Lane/sublane-friendly padding (lane-dense outputs, aligned MXU operands).
    B_pad = _round_up(B, 8)
    tb = min(B_pad, 256)
    B_pad = _round_up(B_pad, tb)
    I_pad = _round_up(I, 128)
    O_pad = _round_up(O, 128)

    # Time-block size: as many timesteps as fit a modest per-buffer VMEM budget
    # (x block bf16 + out block f32, double-buffered by the pipeline), capped at
    # 16 to bound the static unroll of the recurrence.
    bytes_per_step = tb * (I_pad * 2 + O_pad * 4)
    tt = max(1, min(T, 16, (4 << 20) // max(bytes_per_step, 1)))
    T_pad = _round_up(T, tt)

    # bf16 MXU operands (spikes are exactly representable in bf16).
    x_p = jnp.zeros((T_pad, B_pad, I_pad), jnp.bfloat16)
    x_p = x_p.at[:T, :B, :I].set(x_seq.astype(jnp.bfloat16))
    wT_p = jnp.zeros((I_pad, O_pad), jnp.bfloat16)
    wT_p = wT_p.at[:I, :O].set(weight.T.astype(jnp.bfloat16))

    # Merged per-channel parameter block: [bias, alpha, 1 - alpha]; padded lanes
    # stay 0 so padded output columns remain identically zero (no NaN/Inf leak).
    alpha = jnp.exp(-1.0 / tau_m.astype(jnp.float32))
    params = jnp.zeros((3, O_pad), jnp.float32)
    params = params.at[0, :O].set(bias.astype(jnp.float32))
    params = params.at[1, :O].set(alpha)
    params = params.at[2, :O].set(1.0 - alpha)

    mem_p = jnp.zeros((B_pad, O_pad), jnp.float32)
    mem_p = mem_p.at[:B, :O].set(mem0.astype(jnp.float32))

    grid = (B_pad // tb, T_pad // tt)

    flops = 2 * T_pad * B_pad * I_pad * O_pad + 4 * T_pad * B_pad * O_pad
    bytes_accessed = (x_p.size * 2 + wT_p.size * 2 + params.size * 4
                      + mem_p.size * 4 + T_pad * B_pad * O_pad * 4)

    kernel = functools.partial(_readout_seq_kernel, tt=tt, tb=tb)

    out = pl.pallas_call(
        kernel,
        out_shape=jax.ShapeDtypeStruct((T_pad, B_pad, O_pad), jnp.float32),
        grid_spec=pltpu.PrefetchScalarGridSpec(
            num_scalar_prefetch=0,
            grid=grid,
            in_specs=[
                # x: tt timesteps / one batch tile per grid step.
                pl.BlockSpec((tt, tb, I_pad), lambda b, t: (t, b, 0)),
                # W.T: same block for every grid step -> loaded once, VMEM-resident.
                pl.BlockSpec((I_pad, O_pad), lambda b, t: (0, 0)),
                # merged (bias, alpha, 1-alpha) block, also resident.
                pl.BlockSpec((3, O_pad), lambda b, t: (0, 0)),
                # initial mem, one block per batch tile.
                pl.BlockSpec((tb, O_pad), lambda b, t: (b, 0)),
            ],
            out_specs=pl.BlockSpec((tt, tb, O_pad), lambda b, t: (t, b, 0)),
            scratch_shapes=[pltpu.VMEM((tb, O_pad), jnp.float32)],
        ),
        compiler_params=pltpu.CompilerParams(
            dimension_semantics=("parallel", "arbitrary"),
            vmem_limit_bytes=64 * 1024 * 1024,
        ),
        cost_estimate=pl.CostEstimate(
            flops=flops, transcendentals=0, bytes_accessed=bytes_accessed),
    )(x_p, wT_p, params, mem_p)

    return out[:T, :B, :O]
    # TODO(synk): for very large input_dim the resident (I_pad, O_pad) weight block
    # should be tiled over I with a VMEM accumulator; readout layers are small enough
    # that a single resident block is the right choice here.


def readout_integrator_forward(x, weight, bias, tau_m, mem):
    """Single-step convenience wrapper (matches the PyTorch forward signature)."""
    out = readout_integrator_forward_seq(x[None], weight, bias, tau_m, mem)
    return out[0]


def _reference_forward_seq(x_seq, weight, bias, tau_m, mem0):
    alpha = jnp.exp(-1.0 / tau_m)

    def step(mem, x):
        d_input = x.astype(jnp.float32) @ weight.T + bias
        mem_new = alpha * mem + (1.0 - alpha) * d_input
        return mem_new, mem_new

    _, mems = jax.lax.scan(step, mem0, x_seq)
    return mems


if __name__ == "__main__":
    # Small shapes consistent with the module's forward, plus a fused time axis.
    T, batch, input_dim, output_dim = 8, 2, 32, 16
    tauM, tauM_std = 20.0, 5.0

    key = jax.random.PRNGKey(0)
    k_x, k_w, k_b, k_tau = jax.random.split(key, 4)

    # Deterministic parameter init (matching __init__ shapes):
    #   nn.Linear(input_dim, output_dim): weight (O, I), bias (O,)
    #   tau_m ~ Normal(tauM, tauM_std), shape (O,)
    bound = 1.0 / jnp.sqrt(jnp.float32(input_dim))
    weight = jax.random.uniform(
        k_w, (output_dim, input_dim), jnp.float32, -bound, bound)
    bias = jax.random.uniform(k_b, (output_dim,), jnp.float32, -bound, bound)
    tau_m = tauM + tauM_std * jax.random.normal(k_tau, (output_dim,), jnp.float32)

    # Input spikes over T steps and neuron state (set_neuron_state -> zeros).
    x_seq = (jax.random.uniform(k_x, (T, batch, input_dim)) < 0.3).astype(jnp.float32)
    mem0 = jnp.zeros((batch, output_dim), jnp.float32)

    # Run the fused Pallas kernel (all T steps in one pallas_call).
    mem_seq = readout_integrator_forward_seq(x_seq, weight, bias, tau_m, mem0)
    mem_seq = jax.block_until_ready(mem_seq)

    # 1) Exact-path check: reference computed with the same bf16-rounded matmul
    #    operands (accumulation is f32 on both sides) -> tight tolerance.
    w_bf = weight.astype(jnp.bfloat16).astype(jnp.float32)
    x_bf = x_seq.astype(jnp.bfloat16).astype(jnp.float32)
    ref_bf = _reference_forward_seq(x_bf, w_bf, bias, tau_m, mem0)
    assert jnp.allclose(mem_seq, ref_bf, atol=1e-4, rtol=1e-4), \
        "mismatch vs bf16-matched reference"

    # 2) Sanity check against the full-f32 reference (bf16 weight rounding only).
    ref_f32 = _reference_forward_seq(x_seq, weight, bias, tau_m, mem0)
    assert jnp.allclose(mem_seq, ref_f32, atol=2e-2, rtol=2e-2), \
        "mismatch vs f32 reference beyond bf16 rounding"

    # Single-step wrapper sanity check (matches original per-step forward).
    mem1 = jax.block_until_ready(
        readout_integrator_forward(x_seq[0], weight, bias, tau_m, mem0))
    assert jnp.allclose(mem1, ref_bf[0], atol=1e-4, rtol=1e-4), \
        "single-step mismatch"

    # TODO(synk): quantized path (fake_quantize_per_channel_affine on weights /
    # mem) is not exercised here; only the params=None forward is implemented.

    print("KERNEL_OK")
</pallas_src>

<mosaic_0001>
module attributes {stable_mosaic.version = 11 : i64} {
  func.func @_readout_seq_kernel(%arg0: i32, %arg1: i32, %arg2: memref<8x8x128xbf16, #tpu.memory_space<vmem>>, %arg3: memref<128x128xbf16, #tpu.memory_space<vmem>>, %arg4: memref<3x128xf32, #tpu.memory_space<vmem>>, %arg5: memref<8x128xf32, #tpu.memory_space<vmem>>, %arg6: memref<8x8x128xf32, #tpu.memory_space<vmem>>, %arg7: memref<8x128xf32, #tpu.memory_space<vmem>>) attributes {dimension_semantics = [#tpu.dimension_semantics<parallel>, #tpu.dimension_semantics<arbitrary>], iteration_bounds = array<i64: 1, 1>, scalar_prefetch = 0 : i64, scratch_operands = 1 : i64, tpu.core_type = #tpu.core_type<tc>, window_params = [{transform_indices = @transform_0, window_bounds = array<i64: 8, 8, 128>}, {pipeline_mode = #tpu.pipeline_mode<synchronous>, transform_indices = @transform_1, window_bounds = array<i64: 128, 128>}, {pipeline_mode = #tpu.pipeline_mode<synchronous>, transform_indices = @transform_2, window_bounds = array<i64: 3, 128>}, {transform_indices = @transform_3, window_bounds = array<i64: 8, 128>}, {transform_indices = @transform_4, window_bounds = array<i64: 8, 8, 128>}]} {
    %c0_i32 = arith.constant 0 : i32
    %0 = arith.cmpi eq, %arg1, %c0_i32 : i32
    %1 = arith.extui %0 : i1 to i32
    %c0_i32_0 = arith.constant 0 : i32
    %2 = arith.cmpi ne, %1, %c0_i32_0 : i32
    scf.if %2 {
      %c0_32 = arith.constant 0 : index
      %c0_33 = arith.constant 0 : index
      %100 = vector.load %arg5[%c0_32, %c0_33] : memref<8x128xf32, #tpu.memory_space<vmem>>, vector<8x128xf32>
      %c0_34 = arith.constant 0 : index
      %c0_35 = arith.constant 0 : index
      %101 = vector.load %arg7[%c0_34, %c0_35] : memref<8x128xf32, #tpu.memory_space<vmem>>, vector<8x128xf32>
      tpu.vector_store %arg7[%c0_34, %c0_35], %100 {strides = array<i32>} : memref<8x128xf32, #tpu.memory_space<vmem>>, vector<8x128xf32>,
    } else {
    }
    %c0 = arith.constant 0 : index
    %c0_1 = arith.constant 0 : index
    %c0_2 = arith.constant 0 : index
    %3 = vector.load %arg2[%c0, %c0_1, %c0_2] : memref<8x8x128xbf16, #tpu.memory_space<vmem>>, vector<8x8x128xbf16>
    %4 = vector.shape_cast %3 : vector<8x8x128xbf16> to vector<64x128xbf16>
    %c0_3 = arith.constant 0 : index
    %c0_4 = arith.constant 0 : index
    %5 = vector.load %arg3[%c0_3, %c0_4] : memref<128x128xbf16, #tpu.memory_space<vmem>>, vector<128x128xbf16>
    %cst = arith.constant dense<0.000000e+00> : vector<64x128xf32>
    %6 = tpu.matmul %4, %5, %cst {dimension_numbers = #tpu.dot_dimension_numbers<[1], [0], [0], [1], [0, 0, 1, 1], [], []>} : vector<64x128xbf16>, vector<128x128xbf16>, vector<64x128xf32> -> vector<64x128xf32>
    %c0_5 = arith.constant 0 : index
    %c0_6 = arith.constant 0 : index
    %7 = vector.load %arg4[%c0_5, %c0_6] : memref<3x128xf32, #tpu.memory_space<vmem>>, vector<1x128xf32>
    %c1 = arith.constant 1 : index
    %c0_7 = arith.constant 0 : index
    %8 = vector.load %arg4[%c1, %c0_7] : memref<3x128xf32, #tpu.memory_space<vmem>>, vector<1x128xf32>
    %c2 = arith.constant 2 : index
    %c0_8 = arith.constant 0 : index
    %9 = vector.load %arg4[%c2, %c0_8] : memref<3x128xf32, #tpu.memory_space<vmem>>, vector<1x128xf32>
    %c0_9 = arith.constant 0 : index
    %c0_10 = arith.constant 0 : index
    %10 = vector.load %arg7[%c0_9, %c0_10] : memref<8x128xf32, #tpu.memory_space<vmem>>, vector<8x128xf32>
    %11 = vector.extract_strided_slice %6 {offsets = [0, 0], sizes = [8, 128], strides = [1, 1]} : vector<64x128xf32> to vector<8x128xf32>
    %12 = vector.broadcast %8 : vector<1x128xf32> to vector<8x128xf32>
    %13 = arith.mulf %12, %10 : vector<8x128xf32>
    %14 = vector.broadcast %7 : vector<1x128xf32> to vector<8x128xf32>
    %15 = arith.addf %11, %14 : vector<8x128xf32>
    %16 = vector.broadcast %9 : vector<1x128xf32> to vector<8x128xf32>
    %17 = arith.mulf %16, %15 : vector<8x128xf32>
    %18 = arith.addf %13, %17 : vector<8x128xf32>
    %c0_11 = arith.constant 0 : index
    %c0_12 = arith.constant 0 : index
    %c0_13 = arith.constant 0 : index
    %19 = vector.load %arg6[%c0_11, %c0_12, %c0_13] : memref<8x8x128xf32, #tpu.memory_space<vmem>>, vector<1x8x128xf32>
    %20 = vector.shape_cast %19 : vector<1x8x128xf32> to vector<8x128xf32>
    %21 = vector.shape_cast %18 : vector<8x128xf32> to vector<1x8x128xf32>
    tpu.vector_store %arg6[%c0_11, %c0_12, %c0_13], %21 {strides = array<i32>} : memref<8x8x128xf32, #tpu.memory_space<vmem>>, vector<1x8x128xf32>,
    %22 = vector.extract_strided_slice %6 {offsets = [8, 0], sizes = [8, 128], strides = [1, 1]} : vector<64x128xf32> to vector<8x128xf32>
    %23 = vector.broadcast %8 : vector<1x128xf32> to vector<8x128xf32>
    %24 = arith.mulf %23, %18 : vector<8x128xf32>
    %25 = vector.broadcast %7 : vector<1x128xf32> to vector<8x128xf32>
    %26 = arith.addf %22, %25 : vector<8x128xf32>
    %27 = vector.broadcast %9 : vector<1x128xf32> to vector<8x128xf32>
    %28 = arith.mulf %27, %26 : vector<8x128xf32>
    %29 = arith.addf %24, %28 : vector<8x128xf32>
    %c1_14 = arith.constant 1 : index
    %c0_15 = arith.constant 0 : index
    %c0_16 = arith.constant 0 : index
    %30 = vector.load %arg6[%c1_14, %c0_15, %c0_16] : memref<8x8x128xf32, #tpu.memory_space<vmem>>, vector<1x8x128xf32>
    %31 = vector.shape_cast %30 : vector<1x8x128xf32> to vector<8x128xf32>
    %32 = vector.shape_cast %29 : vector<8x128xf32> to vector<1x8x128xf32>
    tpu.vector_store %arg6[%c1_14, %c0_15, %c0_16], %32 {strides = array<i32>} : memref<8x8x128xf32, #tpu.memory_space<vmem>>, vector<1x8x128xf32>,
    %33 = vector.extract_strided_slice %6 {offsets = [16, 0], sizes = [8, 128], strides = [1, 1]} : vector<64x128xf32> to vector<8x128xf32>
    %34 = vector.broadcast %8 : vector<1x128xf32> to vector<8x128xf32>
    %35 = arith.mulf %34, %29 : vector<8x128xf32>
    %36 = vector.broadcast %7 : vector<1x128xf32> to vector<8x128xf32>
    %37 = arith.addf %33, %36 : vector<8x128xf32>
    %38 = vector.broadcast %9 : vector<1x128xf32> to vector<8x128xf32>
    %39 = arith.mulf %38, %37 : vector<8x128xf32>
    %40 = arith.addf %35, %39 : vector<8x128xf32>
    %c2_17 = arith.constant 2 : index
    %c0_18 = arith.constant 0 : index
    %c0_19 = arith.constant 0 : index
    %41 = vector.load %arg6[%c2_17, %c0_18, %c0_19] : memref<8x8x128xf32, #tpu.memory_space<vmem>>, vector<1x8x128xf32>
    %42 = vector.shape_cast %41 : vector<1x8x128xf32> to vector<8x128xf32>
    %43 = vector.shape_cast %40 : vector<8x128xf32> to vector<1x8x128xf32>
    tpu.vector_store %arg6[%c2_17, %c0_18, %c0_19], %43 {strides = array<i32>} : memref<8x8x128xf32, #tpu.memory_space<vmem>>, vector<1x8x128xf32>,
    %44 = vector.extract_strided_slice %6 {offsets = [24, 0], sizes = [8, 128], strides = [1, 1]} : vector<64x128xf32> to vector<8x128xf32>
    %45 = vector.broadcast %8 : vector<1x128xf32> to vector<8x128xf32>
    %46 = arith.mulf %45, %40 : vector<8x128xf32>
    %47 = vector.broadcast %7 : vector<1x128xf32> to vector<8x128xf32>
    %48 = arith.addf %44, %47 : vector<8x128xf32>
    %49 = vector.broadcast %9 : vector<1x128xf32> to vector<8x128xf32>
    %50 = arith.mulf %49, %48 : vector<8x128xf32>
    %51 = arith.addf %46, %50 : vector<8x128xf32>
    %c3 = arith.constant 3 : index
    %c0_20 = arith.constant 0 : index
    %c0_21 = arith.constant 0 : index
    %52 = vector.load %arg6[%c3, %c0_20, %c0_21] : memref<8x8x128xf32, #tpu.memory_space<vmem>>, vector<1x8x128xf32>
    %53 = vector.shape_cast %52 : vector<1x8x128xf32> to vector<8x128xf32>
    %54 = vector.shape_cast %51 : vector<8x128xf32> to vector<1x8x128xf32>
    tpu.vector_store %arg6[%c3, %c0_20, %c0_21], %54 {strides = array<i32>} : memref<8x8x128xf32, #tpu.memory_space<vmem>>, vector<1x8x128xf32>,
    %55 = vector.extract_strided_slice %6 {offsets = [32, 0], sizes = [8, 128], strides = [1, 1]} : vector<64x128xf32> to vector<8x128xf32>
    %56 = vector.broadcast %8 : vector<1x128xf32> to vector<8x128xf32>
    %57 = arith.mulf %56, %51 : vector<8x128xf32>
    %58 = vector.broadcast %7 : vector<1x128xf32> to vector<8x128xf32>
    %59 = arith.addf %55, %58 : vector<8x128xf32>
    %60 = vector.broadcast %9 : vector<1x128xf32> to vector<8x128xf32>
    %61 = arith.mulf %60, %59 : vector<8x128xf32>
    %62 = arith.addf %57, %61 : vector<8x128xf32>
    %c4 = arith.constant 4 : index
    %c0_22 = arith.constant 0 : index
    %c0_23 = arith.constant 0 : index
    %63 = vector.load %arg6[%c4, %c0_22, %c0_23] : memref<8x8x128xf32, #tpu.memory_space<vmem>>, vector<1x8x128xf32>
    %64 = vector.shape_cast %63 : vector<1x8x128xf32> to vector<8x128xf32>
    %65 = vector.shape_cast %62 : vector<8x128xf32> to vector<1x8x128xf32>
    tpu.vector_store %arg6[%c4, %c0_22, %c0_23], %65 {strides = array<i32>} : memref<8x8x128xf32, #tpu.memory_space<vmem>>, vector<1x8x128xf32>,
    %66 = vector.extract_strided_slice %6 {offsets = [40, 0], sizes = [8, 128], strides = [1, 1]} : vector<64x128xf32> to vector<8x128xf32>
    %67 = vector.broadcast %8 : vector<1x128xf32> to vector<8x128xf32>
    %68 = arith.mulf %67, %62 : vector<8x128xf32>
    %69 = vector.broadcast %7 : vector<1x128xf32> to vector<8x128xf32>
    %70 = arith.addf %66, %69 : vector<8x128xf32>
    %71 = vector.broadcast %9 : vector<1x128xf32> to vector<8x128xf32>
    %72 = arith.mulf %71, %70 : vector<8x128xf32>
    %73 = arith.addf %68, %72 : vector<8x128xf32>
    %c5 = arith.constant 5 : index
    %c0_24 = arith.constant 0 : index
    %c0_25 = arith.constant 0 : index
    %74 = vector.load %arg6[%c5, %c0_24, %c0_25] : memref<8x8x128xf32, #tpu.memory_space<vmem>>, vector<1x8x128xf32>
    %75 = vector.shape_cast %74 : vector<1x8x128xf32> to vector<8x128xf32>
    %76 = vector.shape_cast %73 : vector<8x128xf32> to vector<1x8x128xf32>
    tpu.vector_store %arg6[%c5, %c0_24, %c0_25], %76 {strides = array<i32>} : memref<8x8x128xf32, #tpu.memory_space<vmem>>, vector<1x8x128xf32>,
    %77 = vector.extract_strided_slice %6 {offsets = [48, 0], sizes = [8, 128], strides = [1, 1]} : vector<64x128xf32> to vector<8x128xf32>
    %78 = vector.broadcast %8 : vector<1x128xf32> to vector<8x128xf32>
    %79 = arith.mulf %78, %73 : vector<8x128xf32>
    %80 = vector.broadcast %7 : vector<1x128xf32> to vector<8x128xf32>
    %81 = arith.addf %77, %80 : vector<8x128xf32>
    %82 = vector.broadcast %9 : vector<1x128xf32> to vector<8x128xf32>
    %83 = arith.mulf %82, %81 : vector<8x128xf32>
    %84 = arith.addf %79, %83 : vector<8x128xf32>
    %c6 = arith.constant 6 : index
    %c0_26 = arith.constant 0 : index
    %c0_27 = arith.constant 0 : index
    %85 = vector.load %arg6[%c6, %c0_26, %c0_27] : memref<8x8x128xf32, #tpu.memory_space<vmem>>, vector<1x8x128xf32>
    %86 = vector.shape_cast %85 : vector<1x8x128xf32> to vector<8x128xf32>
    %87 = vector.shape_cast %84 : vector<8x128xf32> to vector<1x8x128xf32>
    tpu.vector_store %arg6[%c6, %c0_26, %c0_27], %87 {strides = array<i32>} : memref<8x8x128xf32, #tpu.memory_space<vmem>>, vector<1x8x128xf32>,
    %88 = vector.extract_strided_slice %6 {offsets = [56, 0], sizes = [8, 128], strides = [1, 1]} : vector<64x128xf32> to vector<8x128xf32>
    %89 = vector.broadcast %8 : vector<1x128xf32> to vector<8x128xf32>
    %90 = arith.mulf %89, %84 : vector<8x128xf32>
    %91 = vector.broadcast %7 : vector<1x128xf32> to vector<8x128xf32>
    %92 = arith.addf %88, %91 : vector<8x128xf32>
    %93 = vector.broadcast %9 : vector<1x128xf32> to vector<8x128xf32>
    %94 = arith.mulf %93, %92 : vector<8x128xf32>
    %95 = arith.addf %90, %94 : vector<8x128xf32>
    %c7 = arith.constant 7 : index
    %c0_28 = arith.constant 0 : index
    %c0_29 = arith.constant 0 : index
    %96 = vector.load %arg6[%c7, %c0_28, %c0_29] : memref<8x8x128xf32, #tpu.memory_space<vmem>>, vector<1x8x128xf32>
    %97 = vector.shape_cast %96 : vector<1x8x128xf32> to vector<8x128xf32>
    %98 = vector.shape_cast %95 : vector<8x128xf32> to vector<1x8x128xf32>
    tpu.vector_store %arg6[%c7, %c0_28, %c0_29], %98 {strides = array<i32>} : memref<8x8x128xf32, #tpu.memory_space<vmem>>, vector<1x8x128xf32>,
    %c0_30 = arith.constant 0 : index
    %c0_31 = arith.constant 0 : index
    %99 = vector.load %arg7[%c0_30, %c0_31] : memref<8x128xf32, #tpu.memory_space<vmem>>, vector<8x128xf32>
    tpu.vector_store %arg7[%c0_30, %c0_31], %95 {strides = array<i32>} : memref<8x128xf32, #tpu.memory_space<vmem>>, vector<8x128xf32>,
    return
  }
  func.func @transform_0(%arg0: i32, %arg1: i32) -> (i32, i32, i32) {
    %c0_i32 = arith.constant 0 : i32
    %c0_i32_0 = arith.constant 0 : i32
    return %arg1, %arg0, %c0_i32 : i32, i32, i32
  }
  func.func @transform_1(%arg0: i32, %arg1: i32) -> (i32, i32) {
    %c0_i32 = arith.constant 0 : i32
    %c0_i32_0 = arith.constant 0 : i32
    %c0_i32_1 = arith.constant 0 : i32
    return %c0_i32, %c0_i32_0 : i32, i32
  }
  func.func @transform_2(%arg0: i32, %arg1: i32) -> (i32, i32) {
    %c0_i32 = arith.constant 0 : i32
    %c0_i32_0 = arith.constant 0 : i32
    %c0_i32_1 = arith.constant 0 : i32
    return %c0_i32, %c0_i32_0 : i32, i32
  }
  func.func @transform_3(%arg0: i32, %arg1: i32) -> (i32, i32) {
    %c0_i32 = arith.constant 0 : i32
    %c0_i32_0 = arith.constant 0 : i32
    return %arg0, %c0_i32 : i32, i32
  }
  func.func @transform_4(%arg0: i32, %arg1: i32) -> (i32, i32, i32) {
    %c0_i32 = arith.constant 0 : i32
    %c0_i32_0 = arith.constant 0 : i32
    return %arg1, %arg0, %c0_i32 : i32, i32, i32
  }
}

</mosaic_0001>

<llo_original>
// kernel: readout_integrator_forward_seq.1
$region0: #{readout_integrator_forward_seq.1}
  #allocation0 [shape = 'u32[]', space=smem, size = 0x4, offset = 0x4, fixed_abs, tag = 'smem constant byte address 0x4 - core index']
  #allocation1 [shape = 'u32[144,128]{1,0:T(1,128)}', space=vmem, size = 0x12000, scoped, tag = 'internal scratch']
  #allocation2 [shape = 'f32[8,128]{1,0:T(8,128)}', space=vmem, size = 0x1000, scoped, tag = 'scratch operand']
  %s0 = inlined_call_operand.hbm [shape: bf16[8,8,128], index: 0, kind: input, shape index: {}]
  %s1 = inlined_call_operand.hbm [shape: bf16[128,128], index: 1, kind: input, shape index: {}]
  %s2 = inlined_call_operand.hbm [shape: f32[3,128], index: 2, kind: input, shape index: {}]
  %s3 = inlined_call_operand.hbm [shape: f32[8,128], index: 3, kind: input, shape index: {}]
  %s4 = inlined_call_operand.hbm [shape: f32[8,8,128], index: 4, kind: output, shape index: {}]
  %s5 = sld [smem:[#allocation0]]
  $region46: #{readout_integrator_forward_seq.1} parent=0
    _
  %s7 = ssub.s32 1, %s5
  %s8 = scalar_select 0, %s7, %s5
  $region1: #{readout_integrator_forward_seq.1} parent=0
    #allocation3 [shape = 'u8[16384]{0}', space=vmem, size = 0x4000, scoped, tag = 'input window, operand 0, single buffered']
    #allocation4 [shape = 's32[1]{0}', space=sflag, size = 0x4, scoped, tag = 'scoped memory for readout_integrator_forward_seq.1']
    #allocation5 [shape = 's32[1]{0}', space=sflag, size = 0x4, scoped, tag = 'scoped memory for readout_integrator_forward_seq.1']
    #allocation6 [shape = 'u8[32768]{0}', space=vmem, size = 0x8000, scoped, tag = 'input window, operand 1, single buffered']
    #allocation7 [shape = 's32[1]{0}', space=sflag, size = 0x4, scoped, tag = 'scoped memory for readout_integrator_forward_seq.1']
    #allocation8 [shape = 'u8[2048]{0}', space=vmem, size = 0x800, scoped, tag = 'input window, operand 2, single buffered']
    #allocation9 [shape = 'u8[4096]{0}', space=vmem, size = 0x1000, scoped, tag = 'input window, operand 3, single buffered']
    #allocation10 [shape = 's32[1]{0}', space=sflag, size = 0x4, scoped, tag = 'scoped memory for readout_integrator_forward_seq.1']
    #allocation11 [shape = 'u8[32768]{0}', space=vmem, size = 0x8000, scoped, tag = 'output window, operand 0, single buffered']
    %9 = vsyncpa [#allocation4], 0
    %10 = vsyncpa [#allocation7], 0
    %11 = vsyncpa [#allocation10], 0
    %12 = vsyncpa [#allocation5], 0
    // Predicated region
    $region2: #{readout_integrator_forward_seq.1} parent=1 // pred_check
      _
    $region3: #{readout_integrator_forward_seq.1} parent=1 // pred_check_branch
      %14 = sbr.rel (0) target = $region5
    $region4: #{readout_integrator_forward_seq.1} parent=1 // pred_region
      %s16 = ssub.s32 512, 512
      %17 = vsyncadd [#allocation4], %s16
      %s18 = sshll.u32 [#allocation3], 4
      %s19 = int_to_ptr.vmem [resolvable:$true] %s18
      %24 = dma.hbm_to_vmem [thread:$0]  %s0, 512, %s19, [#allocation4], 64, 64, 4
    $region5: #{readout_integrator_forward_seq.1} parent=1 // pred_fallthru
      _
    // Predicated region
    $region6: #{readout_integrator_forward_seq.1} parent=1 // pred_check
      _
    $region7: #{readout_integrator_forward_seq.1} parent=1 // pred_check_branch
      %26 = sbr.rel (0) target = $region9
    $region8: #{readout_integrator_forward_seq.1} parent=1 // pred_region
      %s28 = ssub.s32 1024, 1024
      %29 = vsyncadd [#allocation7], %s28
      %s30 = sshll.u32 [#allocation6], 4
      %s31 = int_to_ptr.vmem [resolvable:$true] %s30
      %36 = dma.hbm_to_vmem [thread:$0]  %s1, 1024, %s31, [#allocation7], 64, 64, 4
    $region9: #{readout_integrator_forward_seq.1} parent=1 // pred_fallthru
      _
    // Predicated region
    $region10: #{readout_integrator_forward_seq.1} parent=1 // pred_check
      _
    $region11: #{readout_integrator_forward_seq.1} parent=1 // pred_check_branch
      %38 = sbr.rel (0) target = $region13
    $region12: #{readout_integrator_forward_seq.1} parent=1 // pred_region
      %s40 = ssub.s32 64, 64
      %41 = vsyncadd [#allocation7], %s40
      %s43 = sshll.u32 [#allocation8], 4
      %s44 = int_to_ptr.vmem [resolvable:$true] %s43
      %46 = dma.hbm_to_vmem [thread:$0]  %s2, 64, %s44, [#allocation7]
    $region13: #{readout_integrator_forward_seq.1} parent=1 // pred_fallthru
      _
    // Predicated region
    $region14: #{readout_integrator_forward_seq.1} parent=1 // pred_check
      _
    $region15: #{readout_integrator_forward_seq.1} parent=1 // pred_check_branch
      %48 = sbr.rel (0) target = $region17
    $region16: #{readout_integrator_forward_seq.1} parent=1 // pred_region
      %s50 = ssub.s32 128, 128
      %51 = vsyncadd [#allocation10], %s50
      %s53 = sshll.u32 [#allocation9], 4
      %s54 = int_to_ptr.vmem [resolvable:$true] %s53
      %56 = dma.hbm_to_vmem [thread:$0]  %s3, 128, %s54, [#allocation10]
    $region17: #{readout_integrator_forward_seq.1} parent=1 // pred_fallthru
      _
    // Predicated region
    $region18: #{readout_integrator_forward_seq.1} parent=1 // pred_check
      _
    $region19: #{readout_integrator_forward_seq.1} parent=1 // pred_check_branch
      %58 = sbr.rel (0) target = $region21
    $region20: #{readout_integrator_forward_seq.1} parent=1 // pred_region
      %59 = dma.done [#allocation4], 512
    $region21: #{readout_integrator_forward_seq.1} parent=1 // pred_fallthru
      _
    // Predicated region
    $region22: #{readout_integrator_forward_seq.1} parent=1 // pred_check
      _
    $region23: #{readout_integrator_forward_seq.1} parent=1 // pred_check_branch
      %61 = sbr.rel (0) target = $region25
    $region24: #{readout_integrator_forward_seq.1} parent=1 // pred_region
      %62 = dma.done [#allocation7], 1024
    $region25: #{readout_integrator_forward_seq.1} parent=1 // pred_fallthru
      _
    // Predicated region
    $region26: #{readout_integrator_forward_seq.1} parent=1 // pred_check
      _
    $region27: #{readout_integrator_forward_seq.1} parent=1 // pred_check_branch
      %64 = sbr.rel (0) target = $region29
    $region28: #{readout_integrator_forward_seq.1} parent=1 // pred_region
      %65 = dma.done [#allocation7], 64
    $region29: #{readout_integrator_forward_seq.1} parent=1 // pred_fallthru
      _
    // Predicated region
    $region30: #{readout_integrator_forward_seq.1} parent=1 // pred_check
      _
    $region31: #{readout_integrator_forward_seq.1} parent=1 // pred_check_branch
      %67 = sbr.rel (0) target = $region33
    $region32: #{readout_integrator_forward_seq.1} parent=1 // pred_region
      %68 = dma.done [#allocation10], 128
    $region33: #{readout_integrator_forward_seq.1} parent=1 // pred_fallthru
      _
    %p70 = scmp.eq.s32.totalorder 0, 0
    // Predicated region
    $region34: #{readout_integrator_forward_seq.1} parent=1 // pred_check
      %p71 = pneg %p70
    $region35: #{readout_integrator_forward_seq.1} parent=1 // pred_check_branch
      %73 = sbr.rel (%p71) target = $region37
    $region36: #{readout_integrator_forward_seq.1} parent=1 // pred_region
      %v74 = vld [vmem:[#allocation9] sm:$0xff]
      %75 = vst [vmem:[#allocation2] sm:$0xff] %v74
    $region37: #{readout_integrator_forward_seq.1} parent=1 // pred_fallthru
      _
    %v76 = vld [vmem:[#allocation3] sm:$0xf]
    %v77 = vld [vmem:[#allocation3 + $0x4] sm:$0xf]
    %v78 = vld [vmem:[#allocation3 + $0x8] sm:$0xf]
    %v79 = vld [vmem:[#allocation3 + $0xc] sm:$0xf]
    %v80 = vld [vmem:[#allocation3 + $0x10] sm:$0xf]
    %v81 = vld [vmem:[#allocation3 + $0x14] sm:$0xf]
    %v82 = vld [vmem:[#allocation3 + $0x18] sm:$0xf]
    %v83 = vld [vmem:[#allocation3 + $0x1c] sm:$0xf]
    %v84 = vld [vmem:[#allocation6] sm:$0xf]
    %v85 = vld [vmem:[#allocation6 + $0x4] sm:$0xf]
    %v86 = vld [vmem:[#allocation6 + $0x8] sm:$0xf]
    %v87 = vld [vmem:[#allocation6 + $0xc] sm:$0xf]
    %v88 = vld [vmem:[#allocation6 + $0x10] sm:$0xf]
    %v89 = vld [vmem:[#allocation6 + $0x14] sm:$0xf]
    %v90 = vld [vmem:[#allocation6 + $0x18] sm:$0xf]
    %v91 = vld [vmem:[#allocation6 + $0x1c] sm:$0xf]
    %v92 = vld [vmem:[#allocation6 + $0x20] sm:$0xf]
    %v93 = vld [vmem:[#allocation6 + $0x24] sm:$0xf]
    %v94 = vld [vmem:[#allocation6 + $0x28] sm:$0xf]
    %v95 = vld [vmem:[#allocation6 + $0x2c] sm:$0xf]
    %v96 = vld [vmem:[#allocation6 + $0x30] sm:$0xf]
    %v97 = vld [vmem:[#allocation6 + $0x34] sm:$0xf]
    %v98 = vld [vmem:[#allocation6 + $0x38] sm:$0xf]
    %v99 = vld [vmem:[#allocation6 + $0x3c] sm:$0xf]
    %v108 = vunpack.c.l.b16 %v76
    %v109 = vunpack.c.l.b16 %v77
    %v110 = vunpack.c.l.b16 %v78
    %v111 = vunpack.c.l.b16 %v79
    %v112 = vunpack.c.l.b16 %v80
    %v113 = vunpack.c.l.b16 %v81
    %v114 = vunpack.c.l.b16 %v82
    %v115 = vunpack.c.l.b16 %v83
    %v116 = vpack.c.b16 %v109, %v108
    %v117 = vpack.c.b16 %v111, %v110
    %v118 = vpack.c.b16 %v113, %v112
    %v119 = vpack.c.b16 %v115, %v114
    %v140 = vunpack.c.l.b16 %v84
    %v141 = vunpack.c.l.b16 %v85
    %v142 = vunpack.c.l.b16 %v86
    %v143 = vunpack.c.l.b16 %v87
    %v144 = vunpack.c.l.b16 %v88
    %v145 = vunpack.c.l.b16 %v89
    %v146 = vunpack.c.l.b16 %v90
    %v147 = vunpack.c.l.b16 %v91
    %v148 = vunpack.c.l.b16 %v92
    %v149 = vunpack.c.l.b16 %v93
    %v150 = vunpack.c.l.b16 %v94
    %v151 = vunpack.c.l.b16 %v95
    %v152 = vunpack.c.l.b16 %v96
    %v153 = vunpack.c.l.b16 %v97
    %v154 = vunpack.c.l.b16 %v98
    %v155 = vunpack.c.l.b16 %v99
    %v156 = vpack.c.b16 %v141, %v140
    %v157 = vpack.c.b16 %v143, %v142
    %v158 = vpack.c.b16 %v145, %v144
    %v159 = vpack.c.b16 %v147, %v146
    %v160 = vpack.c.b16 %v149, %v148
    %v161 = vpack.c.b16 %v151, %v150
    %v162 = vpack.c.b16 %v153, %v152
    %v163 = vpack.c.b16 %v155, %v154
    %172 = vmatprep.subr.bf16.mxu0 0
    %173 = vmatpush1.bf16.msra.mxu0 %v156
    %174 = vmatprep.subr.bf16.mxu0 0
    %175 = vmatpush1.bf16.msra.mxu0 %v157
    %176 = vmatprep.subr.bf16.mxu0 0
    %177 = vmatpush1.bf16.msra.mxu0 %v158
    %178 = vmatprep.subr.bf16.mxu0 0
    %179 = vmatpush1.bf16.msra.mxu0 %v159
    %180 = vmatprep.subr.bf16.mxu0 0
    %181 = vmatpush1.bf16.msra.mxu0 %v160
    %182 = vmatprep.subr.bf16.mxu0 0
    %183 = vmatpush1.bf16.msra.mxu0 %v161
    %184 = vmatprep.subr.bf16.mxu0 0
    %185 = vmatpush1.bf16.msra.mxu0 %v162
    %186 = vmatprep.subr.bf16.mxu0 0
    %187 = vmatpush1.bf16.msra.mxu0 %v163
    %188 = vmatprep.subr.bf16.mxu0 0
    %189 = vmatpush1.bf16.msra.mxu0 0
    %190 = vmatprep.subr.bf16.mxu0 0
    %191 = vmatpush1.bf16.msra.mxu0 0
    %192 = vmatprep.subr.bf16.mxu0 0
    %193 = vmatpush1.bf16.msra.mxu0 0
    %194 = vmatprep.subr.bf16.mxu0 0
    %195 = vmatpush1.bf16.msra.mxu0 0
    %196 = vmatprep.subr.bf16.mxu0 0
    %197 = vmatpush1.bf16.msra.mxu0 0
    %198 = vmatprep.subr.bf16.mxu0 0
    %199 = vmatpush1.bf16.msra.mxu0 0
    %200 = vmatprep.subr.bf16.mxu0 0
    %201 = vmatpush1.bf16.msra.mxu0 0
    %202 = vmatprep.subr.bf16.mxu0 0
    %203 = vmatpush1.bf16.msra.mxu0 0
    %204 = vmatprep.mubr.bf16.mxu0 0
    %205 = vmatmul.mubr.bf16.gmra.mrb[0].mxu0 %v116
    %v206 = vpop.f32.mrb[0].mxu0
    %v207 = vadd.f32 0.0, %v206
    %v208 = vpop.f32.mrb[0].mxu0
    %v209 = vpop.f32.mrb[0].mxu0
    %v210 = vadd.f32 0.0, %v209
    %v211 = vpop.f32.mrb[0].mxu0
    %212 = vmatprep.mubr.bf16.mxu0 0
    %213 = vmatmul.mubr.bf16.gmra.mrb[0].mxu0 %v117
    %v214 = vpop.f32.mrb[0].mxu0
    %v215 = vadd.f32 0.0, %v214
    %v216 = vpop.f32.mrb[0].mxu0
    %v217 = vpop.f32.mrb[0].mxu0
    %v218 = vadd.f32 0.0, %v217
    %v219 = vpop.f32.mrb[0].mxu0
    %220 = vmatprep.mubr.bf16.mxu0 0
    %221 = vmatmul.mubr.bf16.gmra.mrb[0].mxu0 %v118
    %v222 = vpop.f32.mrb[0].mxu0
    %v223 = vadd.f32 0.0, %v222
    %v224 = vpop.f32.mrb[0].mxu0
    %v225 = vpop.f32.mrb[0].mxu0
    %v226 = vadd.f32 0.0, %v225
    %v227 = vpop.f32.mrb[0].mxu0
    %228 = vmatprep.mubr.bf16.mxu0 0
    %229 = vmatmul.mubr.bf16.gmra.mrb[0].mxu0 %v119
    %v230 = vpop.f32.mrb[0].mxu0
    %v231 = vadd.f32 0.0, %v230
    %v232 = vpop.f32.mrb[0].mxu0
    %v233 = vpop.f32.mrb[0].mxu0
    %v234 = vadd.f32 0.0, %v233
    %v235 = vpop.f32.mrb[0].mxu0
    %236 = vdwg.mxu0
    %v237 = vld [vmem:[#allocation8] sm:$0x1]
    %v238 = vld [vmem:[#allocation8 + $0x1] sm:$0x1]
    %v239 = vld [vmem:[#allocation8 + $0x2] sm:$0x1]
    %v240 = vld [vmem:[#allocation2] sm:$0xff]
    %v241 = vlaneseq
    %v242 = vshrl.u32 %v241, 7
    %v243 = vsub.s32 0, %v242
    %v244 = vrot.slane %v238, %v243
    %v245 = vmul.f32 %v244, %v240
    %v246 = vlaneseq
    %v247 = vshrl.u32 %v246, 7
    %v248 = vsub.s32 0, %v247
    %v249 = vrot.slane %v237, %v248
    %v250 = vadd.f32 %v207, %v249
    %v251 = vlaneseq
    %v252 = vshrl.u32 %v251, 7
    %v253 = vsub.s32 0, %v252
    %v254 = vrot.slane %v239, %v253
    %v255 = vmul.f32 %v254, %v250
    %v256 = vadd.f32 %v245, %v255
    %257 = vst [vmem:[#allocation11] sm:$0xff] %v256
    %v258 = vmul.f32 %v244, %v256
    %v259 = vadd.f32 %v210, %v249
    %v260 = vmul.f32 %v254, %v259
    %v261 = vadd.f32 %v258, %v260
    %s262 = scalar_lea.vmem [#allocation11], 8
    %263 = vst [vmem:[%s262] sm:$0xff] %v261
    %v264 = vmul.f32 %v244, %v261
    %v265 = vadd.f32 %v215, %v249
    %v266 = vmul.f32 %v254, %v265
    %v267 = vadd.f32 %v264, %v266
    %s268 = scalar_lea.vmem [#allocation11], 16
    %269 = vst [vmem:[%s268] sm:$0xff] %v267
    %v270 = vmul.f32 %v244, %v267
    %v271 = vadd.f32 %v218, %v249
    %v272 = vmul.f32 %v254, %v271
    %v273 = vadd.f32 %v270, %v272
    %s274 = scalar_lea.vmem [#allocation11], 24
    %275 = vst [vmem:[%s274] sm:$0xff] %v273
    %v276 = vmul.f32 %v244, %v273
    %v277 = vadd.f32 %v223, %v249
    %v278 = vmul.f32 %v254, %v277
    %v279 = vadd.f32 %v276, %v278
    %s280 = scalar_lea.vmem [#allocation11], 32
    %281 = vst [vmem:[%s280] sm:$0xff] %v279
    %v282 = vmul.f32 %v244, %v279
    %v283 = vadd.f32 %v226, %v249
    %v284 = vmul.f32 %v254, %v283
    %v285 = vadd.f32 %v282, %v284
    %s286 = scalar_lea.vmem [#allocation11], 40
    %287 = vst [vmem:[%s286] sm:$0xff] %v285
    %v288 = vmul.f32 %v244, %v285
    %v289 = vadd.f32 %v231, %v249
    %v290 = vmul.f32 %v254, %v289
    %v291 = vadd.f32 %v288, %v290
    %s292 = scalar_lea.vmem [#allocation11], 48
    %293 = vst [vmem:[%s292] sm:$0xff] %v291
    %v294 = vmul.f32 %v244, %v291
    %v295 = vadd.f32 %v234, %v249
    %v296 = vmul.f32 %v254, %v295
    %v297 = vadd.f32 %v294, %v296
    %s298 = scalar_lea.vmem [#allocation11], 56
    %299 = vst [vmem:[%s298] sm:$0xff] %v297
    %300 = vst [vmem:[#allocation2] sm:$0xff] %v297
    // Predicated region
    $region38: #{readout_integrator_forward_seq.1} parent=1 // pred_check
      _
    $region39: #{readout_integrator_forward_seq.1} parent=1 // pred_check_branch
      %302 = sbr.rel (0) target = $region41
    $region40: #{readout_integrator_forward_seq.1} parent=1 // pred_region
      %s304 = ssub.s32 1024, 1024
      %305 = vsyncadd [#allocation5], %s304
      %s306 = sshll.u32 [#allocation11], 4
      %s307 = int_to_ptr.vmem [resolvable:$true] %s306
      %312 = dma.vmem_to_hbm [thread:$0]  %s307, 1024, %s4, [#allocation5], 128, 128, 8
    $region41: #{readout_integrator_forward_seq.1} parent=1 // pred_fallthru
      _
    // Predicated region
    $region42: #{readout_integrator_forward_seq.1} parent=1 // pred_check
      _
    $region43: #{readout_integrator_forward_seq.1} parent=1 // pred_check_branch
      %314 = sbr.rel (0) target = $region45
    $region44: #{readout_integrator_forward_seq.1} parent=1 // pred_region
      %315 = dma.done [#allocation5], 1024
    $region45: #{readout_integrator_forward_seq.1} parent=1 // pred_fallthru
      _
    %316 = vsyncpa [#allocation4], 1
    %317 = vsyncpa [#allocation7], 1
    %318 = vsyncpa [#allocation10], 1
    %319 = vsyncpa [#allocation5], 1

</llo_original>
